<compile_context>
chip_gen: v7x
topology: tpu7x:2x2x1
jax: 0.10.0
libtpu: 0.0.40
codegen_flags: <defaults>
</compile_context>

<pallas_src>
import functools

import jax
import jax.numpy as jnp
from jax.experimental import pallas as pl
from jax.experimental.pallas import tpu as pltpu

_MIB = 1024 * 1024


# ----------------------------------------------------------------------------
# Hardware query (trace-time)
# ----------------------------------------------------------------------------
def _tpu_params():
    """Returns (vmem_capacity_bytes, multi_tensorcore?) with safe fallbacks."""
    vmem_cap = 64 * _MIB            # conservative default (v7x per-TC figure)
    multi_tc = False
    try:
        info = pltpu.get_tpu_info()
        vmem_cap = int(getattr(info, "vmem_capacity_bytes", vmem_cap))
        cores = getattr(info, "num_cores", None) or getattr(info, "cores_per_chip", None)
        if cores is not None:
            multi_tc = int(cores) > 1
        else:
            # Heuristic: v7x exposes 64 MiB VMEM per TensorCore (2 TCs/chip);
            # v5e/v6e expose 128 MiB and have a single TC.
            multi_tc = vmem_cap <= 96 * _MIB
    except Exception:
        pass
    return vmem_cap, multi_tc


def _cost_estimate(B, C, HW, mid, itemsize):
    # Memory-bound op: 2 passes over x-sized data, tiny matmul FLOPs.
    flops = int(B) * int(HW) * (2 * mid * C + 2 * mid + 6 * C)
    transcendentals = int(B) * (int(HW) + C)            # sigmoids
    bytes_accessed = 2 * int(B) * C * int(HW) * int(itemsize) \
        + (mid * C + 3 * mid + 1) * 4
    return pl.CostEstimate(flops=flops, transcendentals=transcendentals,
                           bytes_accessed=bytes_accessed)


# ----------------------------------------------------------------------------
# Kernels
# ----------------------------------------------------------------------------
def _fused_kernel(x_ref, w1_ref, b1_ref, w2_ref, b2_ref, o_ref, *, inv_hw):
    """One whole (C, HW) batch block per grid step; channel gate in-kernel."""
    x = x_ref[0].astype(jnp.float32)                               # (C, HW) upcast in VMEM

    # --- spatial branch: 1x1 convs as (mid,C)@(C,HW) matmul + VPU epilogue --
    h = jnp.dot(w1_ref[...], x, preferred_element_type=jnp.float32)
    h = jnp.maximum(h + b1_ref[...], 0.0)                          # (mid, HW)
    # second 1x1 conv (mid -> 1): tiny sublane reduction, lane-dense result.
    s = jnp.sum(h * w2_ref[...], axis=0, keepdims=True) + b2_ref[0]
    spatial_w = jax.nn.sigmoid(s)                                  # (1, HW)

    # --- channel branch: global avg pool (lane reduction) + self-correlation -
    cvec = jnp.sum(x, axis=1, keepdims=True) * inv_hw              # (C, 1)
    channel_w = jax.nn.sigmoid(cvec * jnp.sum(cvec))               # (C, 1)

    # --- combine; single downcast right before the lane-dense store ---------
    o_ref[0] = (x * spatial_w * channel_w).astype(o_ref.dtype)


def _tiled_kernel(x_ref, w1_ref, b1_ref, w2_ref, cw_ref, b2_ref, o_ref):
    """(C, thw) block of one batch; channel gate precomputed and passed in."""
    x = x_ref[0].astype(jnp.float32)                               # (C, T)
    h = jnp.dot(w1_ref[...], x, preferred_element_type=jnp.float32)
    h = jnp.maximum(h + b1_ref[...], 0.0)                          # (mid, T)
    s = jnp.sum(h * w2_ref[...], axis=0, keepdims=True) + b2_ref[0]
    spatial_w = jax.nn.sigmoid(s)                                  # (1, T)
    o_ref[0] = (x * spatial_w * cw_ref[0]).astype(o_ref.dtype)     # cw: (C, 1)


# ----------------------------------------------------------------------------
# pallas_call wrappers
# ----------------------------------------------------------------------------
def _fused_call(x3, w1, b1c, w2c, b2s, *, B, C, HW, mid, out_dtype,
                vmem_limit, cost):
    kernel = functools.partial(_fused_kernel, inv_hw=1.0 / HW)
    return pl.pallas_call(
        kernel,
        out_shape=jax.ShapeDtypeStruct((B, C, HW), out_dtype),
        grid_spec=pltpu.PrefetchScalarGridSpec(
            num_scalar_prefetch=0,
            grid=(B,),
            in_specs=[
                pl.BlockSpec((1, C, HW), lambda b: (b, 0, 0)),          # x (native layout/dtype)
                pl.BlockSpec((mid, C), lambda b: (0, 0)),               # w1
                pl.BlockSpec((mid, 1), lambda b: (0, 0)),               # b1 (column)
                pl.BlockSpec((mid, 1), lambda b: (0, 0)),               # w2 (column)
                pl.BlockSpec(memory_space=pltpu.MemorySpace.SMEM),      # b2 scalar
            ],
            out_specs=pl.BlockSpec((1, C, HW), lambda b: (b, 0, 0)),
        ),
        compiler_params=pltpu.CompilerParams(
            dimension_semantics=("parallel",),
            vmem_limit_bytes=int(vmem_limit),
        ),
        cost_estimate=cost,
    )(x3, w1, b1c, w2c, b2s)


def _pick_hw_tile(hw, c, mid, in_itemsize, budget_bytes, lane_cap=None):
    """Largest lane-dense HW tile whose resident footprint fits the budget."""
    # Bytes per lane-column in flight for one tiled step:
    #   2x input block + 2x output block (double-buffered pipeline)
    per_lane = 4 * c * in_itemsize
    #   f32 elementwise temp (x * spatial_w * channel_w before the downcast)
    per_lane += c * 4
    #   explicit f32 upcast copy of x when the I/O dtype is narrower than f32
    if in_itemsize != 4:
        per_lane += c * 4
    #   (mid, thw) intermediate h + a few (1, thw) rows
    per_lane += mid * 4 + 16

    max_lanes = max(128, (budget_bytes // max(per_lane, 1)) // 128 * 128)
    if lane_cap is not None:
        max_lanes = min(max_lanes, max(128, (lane_cap // 128) * 128))

    if max_lanes >= hw:
        return hw                      # full row per batch (block == full dims)

    # Prefer an evenly dividing tile (no partial boundary block) as long as it
    # doesn't shrink the block below ~half the budget-sized tile; otherwise
    # take the big tile and let cdiv + masked boundary block handle the tail.
    t = max_lanes
    floor = max(128, (max_lanes // 2 // 128) * 128)
    while t >= floor:
        if hw % t == 0:
            return t
        t -= 128
    return max_lanes


def _tiled_call(x3, w1, b1c, w2c, b2s, *, B, C, HW, mid, out_dtype,
                block_budget, vmem_limit, cost, tile_lane_cap=None):
    # Channel gate from a cheap (B, C) pre-reduction.  x3 is read in its
    # native (possibly bf16) dtype with f32 accumulation, so this extra pass
    # moves the minimum possible bytes.
    cvec = jnp.mean(x3, axis=-1, dtype=jnp.float32)                 # (B, C)
    d = cvec * jnp.sum(cvec, axis=-1, keepdims=True)                # (B, C)
    channel_w = jax.nn.sigmoid(d)[:, :, None]                       # (B, C, 1) f32

    itemsize = jnp.dtype(x3.dtype).itemsize
    thw = _pick_hw_tile(HW, C, mid, itemsize, block_budget, tile_lane_cap)
    grid = (B, pl.cdiv(HW, thw))

    return pl.pallas_call(
        _tiled_kernel,
        out_shape=jax.ShapeDtypeStruct((B, C, HW), out_dtype),
        grid_spec=pltpu.PrefetchScalarGridSpec(
            num_scalar_prefetch=0,
            grid=grid,
            in_specs=[
                pl.BlockSpec((1, C, thw), lambda b, t: (b, 0, t)),      # x tile
                pl.BlockSpec((mid, C), lambda b, t: (0, 0)),            # w1
                pl.BlockSpec((mid, 1), lambda b, t: (0, 0)),            # b1
                pl.BlockSpec((mid, 1), lambda b, t: (0, 0)),            # w2
                pl.BlockSpec((1, C, 1), lambda b, t: (b, 0, 0)),        # channel gate
                pl.BlockSpec(memory_space=pltpu.MemorySpace.SMEM),      # b2 scalar
            ],
            out_specs=pl.BlockSpec((1, C, thw), lambda b, t: (b, 0, t)),
        ),
        compiler_params=pltpu.CompilerParams(
            # Both axes independent -> v7x shards HW tiles across its 2 TCs
            # even when B == 1.
            dimension_semantics=("parallel", "parallel"),
            vmem_limit_bytes=int(vmem_limit),
        ),
        cost_estimate=cost,
    )(x3, w1, b1c, w2c, channel_w, b2s)


def temporal_attention_block(x_nchw, w1, b1, w2, b2, *,
                             force_tiled=False, tile_lane_cap=None):
    """TemporalAttentionBlock forward.

    x_nchw: (B, C, H, W) float (f32 / bf16 / ...); output has the same dtype.
    w1: (mid, C)   conv1 1x1 weight (PyTorch (mid, C, 1, 1) squeezed)
    b1: (mid,)
    w2: (1, mid)   conv2 1x1 weight (PyTorch (1, mid, 1, 1) squeezed)
    b2: (1,)
    """
    B, C, H, W = x_nchw.shape
    HW = H * W
    mid = w1.shape[0]
    out_dtype = x_nchw.dtype
    itemsize = jnp.dtype(out_dtype).itemsize

    # Native layout: NCHW -> (B, C, HW) is a pure reshape; dtype preserved so
    # the HBM transfer is in the caller's precision.
    x3 = x_nchw.reshape(B, C, HW)
    w1m = w1.astype(jnp.float32)                       # (mid, C)
    b1c = b1.reshape(mid, 1).astype(jnp.float32)       # (mid, 1)
    w2c = w2.reshape(mid, 1).astype(jnp.float32)       # (mid, 1) column
    b2s = b2.reshape(1).astype(jnp.float32)            # (1,) scalar in SMEM

    # Generation-aware VMEM sizing.
    vmem_cap, multi_tc = _tpu_params()
    block_budget = int(vmem_cap * 0.72)                # ~92 MiB on v5e/v6e, ~46 MiB on v7x
    vmem_limit = int(vmem_cap * 0.875)                 # ~112 MiB / ~56 MiB

    # Resident VMEM of the fused path: double-buffered in/out blocks, in-kernel
    # f32 working copy + elementwise temp, the (mid, HW) intermediate, rows.
    fused_bytes = 4 * C * HW * itemsize                # 2x in + 2x out blocks
    fused_bytes += C * HW * 4                          # f32 elementwise temp
    if itemsize != 4:
        fused_bytes += C * HW * 4                      # explicit f32 upcast of x
    fused_bytes += mid * HW * 4 + 16 * HW              # h + spatial rows
    fused_bytes += (mid * C + 4 * mid) * 4             # weights / biases

    cost = _cost_estimate(B, C, HW, mid, itemsize)

    prefer_fused = (not force_tiled) and (fused_bytes <= block_budget)
    # On multi-TensorCore chips (v7x) a single-batch fused grid pins all work
    # on one core; the two-axis-parallel tiled grid uses both cores' HBM BW.
    if prefer_fused and multi_tc and B == 1:
        prefer_fused = False

    if prefer_fused:
        out3 = _fused_call(x3, w1m, b1c, w2c, b2s, B=B, C=C, HW=HW, mid=mid,
                           out_dtype=out_dtype, vmem_limit=vmem_limit, cost=cost)
    else:
        out3 = _tiled_call(x3, w1m, b1c, w2c, b2s, B=B, C=C, HW=HW, mid=mid,
                           out_dtype=out_dtype, block_budget=block_budget,
                           vmem_limit=vmem_limit, cost=cost,
                           tile_lane_cap=tile_lane_cap)

    return out3.reshape(B, C, H, W)


# ----------------------------------------------------------------------------
# Pure-JAX reference (mirrors the PyTorch forward, f32 math)
# ----------------------------------------------------------------------------
def _reference(x_nchw, w1, b1, w2, b2):
    B, C, H, W = x_nchw.shape
    x3 = x_nchw.reshape(B, C, H * W).astype(jnp.float32)
    h = jnp.maximum(jnp.einsum("mc,bcs->bms", w1, x3) + b1[None, :, None], 0.0)
    s = jnp.einsum("om,bms->bos", w2, h) + b2[None, :, None]       # (B, 1, HW)
    spatial_w = jax.nn.sigmoid(s)
    Bx = x3 * spatial_w
    cvec = jnp.mean(x3, axis=-1)                                   # (B, C)
    d = cvec * jnp.sum(cvec, axis=-1, keepdims=True)               # (B, C)
    channel_w = jax.nn.sigmoid(d)[:, :, None]                      # (B, C, 1)
    return (Bx * channel_w).reshape(B, C, H, W)


if __name__ == "__main__":
    # in_channels must be >= reduction_ratio (8) so mid = C // 8 >= 1.
    B, C, H, W = 2, 16, 16, 16
    reduction_ratio = 8
    mid = C // reduction_ratio

    key = jax.random.PRNGKey(0)
    kx, k1, k2, k3, k4 = jax.random.split(key, 5)

    x = jax.random.normal(kx, (B, C, H, W), dtype=jnp.float32)

    # Parameters in conv-native layout (1x1 conv weights squeezed).
    w1 = 0.1 * jax.random.normal(k1, (mid, C), dtype=jnp.float32)
    b1 = 0.1 * jax.random.normal(k2, (mid,), dtype=jnp.float32)
    w2 = 0.1 * jax.random.normal(k3, (1, mid), dtype=jnp.float32)
    b2 = 0.1 * jax.random.normal(k4, (1,), dtype=jnp.float32)

    ref = jax.block_until_ready(_reference(x, w1, b1, w2, b2))

    # Fused path (single HBM pass over x, channel gate in-kernel), f32 I/O.
    out_fused = jax.block_until_ready(temporal_attention_block(x, w1, b1, w2, b2))
    assert out_fused.shape == (B, C, H, W) and out_fused.dtype == x.dtype
    assert jnp.max(jnp.abs(out_fused - ref)) < 1e-5

    # Size-robust HW-tiled path (forced, with a small lane cap so the HW grid
    # axis is actually exercised: grid = (B, 2)).
    out_tiled = jax.block_until_ready(
        temporal_attention_block(x, w1, b1, w2, b2,
                                 force_tiled=True, tile_lane_cap=128))
    assert out_tiled.shape == (B, C, H, W) and out_tiled.dtype == x.dtype
    assert jnp.max(jnp.abs(out_tiled - ref)) < 1e-5

    # bf16 I/O: data travels HBM<->VMEM in bf16, f32 math in-kernel,
    # output comes back in bf16.
    x_bf16 = x.astype(jnp.bfloat16)
    ref_bf = _reference(x_bf16.astype(jnp.float32), w1, b1, w2, b2)
    out_bf = jax.block_until_ready(temporal_attention_block(x_bf16, w1, b1, w2, b2))
    assert out_bf.dtype == jnp.bfloat16
    assert jnp.max(jnp.abs(out_bf.astype(jnp.float32) - ref_bf)) < 5e-2

    print("KERNEL_OK")
</pallas_src>

<mosaic_0001>
module attributes {stable_mosaic.version = 11 : i64} {
  func.func @_fused_kernel(%arg0: i32, %arg1: memref<1x16x256xf32, #tpu.memory_space<vmem>>, %arg2: memref<2x16xf32, #tpu.memory_space<vmem>>, %arg3: memref<2x1xf32, #tpu.memory_space<vmem>>, %arg4: memref<2x1xf32, #tpu.memory_space<vmem>>, %arg5: memref<1xf32, #tpu.memory_space<smem>>, %arg6: memref<1x16x256xf32, #tpu.memory_space<vmem>>) attributes {dimension_semantics = [#tpu.dimension_semantics<parallel>], iteration_bounds = array<i64: 2>, scalar_prefetch = 0 : i64, scratch_operands = 0 : i64, tpu.core_type = #tpu.core_type<tc>, window_params = [{transform_indices = @transform_0, window_bounds = array<i64: 1, 16, 256>}, {pipeline_mode = #tpu.pipeline_mode<synchronous>, transform_indices = @transform_1, window_bounds = array<i64: 2, 16>}, {pipeline_mode = #tpu.pipeline_mode<synchronous>, transform_indices = @transform_2, window_bounds = array<i64: 2, 1>}, {pipeline_mode = #tpu.pipeline_mode<synchronous>, transform_indices = @transform_3, window_bounds = array<i64: 2, 1>}, {transform_indices = @transform_4, window_bounds = array<i64: 1>}, {transform_indices = @transform_5, window_bounds = array<i64: 1, 16, 256>}]} {
    %c0 = arith.constant 0 : index
    %c0_0 = arith.constant 0 : index
    %c0_1 = arith.constant 0 : index
    %0 = vector.load %arg1[%c0, %c0_0, %c0_1] : memref<1x16x256xf32, #tpu.memory_space<vmem>>, vector<1x16x256xf32>
    %1 = vector.shape_cast %0 : vector<1x16x256xf32> to vector<16x256xf32>
    %c0_2 = arith.constant 0 : index
    %c0_3 = arith.constant 0 : index
    %2 = vector.load %arg2[%c0_2, %c0_3] : memref<2x16xf32, #tpu.memory_space<vmem>>, vector<2x16xf32>
    %cst = arith.constant dense<0.000000e+00> : vector<2x256xf32>
    %3 = tpu.matmul %2, %1, %cst {dimension_numbers = #tpu.dot_dimension_numbers<[1], [0], [0], [1], [0, 0, 1, 1], [], []>} : vector<2x16xf32>, vector<16x256xf32>, vector<2x256xf32> -> vector<2x256xf32>
    %c0_4 = arith.constant 0 : index
    %c0_5 = arith.constant 0 : index
    %4 = vector.load %arg3[%c0_4, %c0_5] : memref<2x1xf32, #tpu.memory_space<vmem>>, vector<2x1xf32>
    %5 = vector.broadcast %4 : vector<2x1xf32> to vector<2x256xf32>
    %6 = arith.addf %3, %5 : vector<2x256xf32>
    %cst_6 = arith.constant 0.000000e+00 : f32
    %7 = vector.broadcast %cst_6 : f32 to vector<2x256xf32>
    %8 = arith.maximumf %6, %7 : vector<2x256xf32>
    %c0_7 = arith.constant 0 : index
    %c0_8 = arith.constant 0 : index
    %9 = vector.load %arg4[%c0_7, %c0_8] : memref<2x1xf32, #tpu.memory_space<vmem>>, vector<2x1xf32>
    %10 = vector.broadcast %9 : vector<2x1xf32> to vector<2x256xf32>
    %11 = arith.mulf %8, %10 : vector<2x256xf32>
    %cst_9 = arith.constant dense<0.000000e+00> : vector<256xf32>
    %12 = vector.multi_reduction <add>, %11, %cst_9 [0] : vector<2x256xf32> to vector<256xf32>
    %13 = vector.shape_cast %12 : vector<256xf32> to vector<1x256xf32>
    %c0_10 = arith.constant 0 : index
    %14 = memref.load %arg5[%c0_10] : memref<1xf32, #tpu.memory_space<smem>>
    %15 = vector.broadcast %14 : f32 to vector<1x256xf32>
    %16 = arith.addf %13, %15 : vector<1x256xf32>
    %17 = arith.negf %16 : vector<1x256xf32>
    %18 = math.exp %17 : vector<1x256xf32>
    %cst_11 = arith.constant 1.000000e+00 : f32
    %19 = vector.broadcast %cst_11 : f32 to vector<1x256xf32>
    %20 = arith.addf %19, %18 : vector<1x256xf32>
    %21 = arith.divf %19, %20 : vector<1x256xf32>
    %cst_12 = arith.constant dense<0.000000e+00> : vector<16xf32>
    %22 = vector.multi_reduction <add>, %1, %cst_12 [1] : vector<16x256xf32> to vector<16xf32>
    %23 = vector.shape_cast %22 : vector<16xf32> to vector<16x1xf32>
    %cst_13 = arith.constant 3.906250e-03 : f32
    %24 = vector.broadcast %cst_13 : f32 to vector<16x1xf32>
    %25 = arith.mulf %23, %24 : vector<16x1xf32>
    %26 = vector.shape_cast %25 : vector<16x1xf32> to vector<1x16x1xf32>
    %cst_14 = arith.constant dense<0.000000e+00> : vector<1xf32>
    %27 = vector.multi_reduction <add>, %26, %cst_14 [1, 2] : vector<1x16x1xf32> to vector<1xf32>
    %28 = vector.shape_cast %27 : vector<1xf32> to vector<1x1x1xf32>
    %29 = vector.extract %28[0, 0, 0] : f32 from vector<1x1x1xf32>
    %30 = vector.broadcast %29 : f32 to vector<16x1xf32>
    %31 = arith.mulf %25, %30 : vector<16x1xf32>
    %32 = arith.negf %31 : vector<16x1xf32>
    %33 = math.exp %32 : vector<16x1xf32>
    %cst_15 = arith.constant 1.000000e+00 : f32
    %34 = vector.broadcast %cst_15 : f32 to vector<16x1xf32>
    %35 = arith.addf %34, %33 : vector<16x1xf32>
    %36 = arith.divf %34, %35 : vector<16x1xf32>
    %37 = vector.broadcast %21 : vector<1x256xf32> to vector<16x256xf32>
    %38 = arith.mulf %1, %37 : vector<16x256xf32>
    %39 = vector.broadcast %36 : vector<16x1xf32> to vector<16x256xf32>
    %40 = arith.mulf %38, %39 : vector<16x256xf32>
    %c0_16 = arith.constant 0 : index
    %c0_17 = arith.constant 0 : index
    %c0_18 = arith.constant 0 : index
    %41 = vector.load %arg6[%c0_16, %c0_17, %c0_18] : memref<1x16x256xf32, #tpu.memory_space<vmem>>, vector<1x16x256xf32>
    %42 = vector.shape_cast %41 : vector<1x16x256xf32> to vector<16x256xf32>
    %43 = vector.shape_cast %40 : vector<16x256xf32> to vector<1x16x256xf32>
    tpu.vector_store %arg6[%c0_16, %c0_17, %c0_18], %43 {strides = array<i32>} : memref<1x16x256xf32, #tpu.memory_space<vmem>>, vector<1x16x256xf32>,
    return
  }
  func.func @transform_0(%arg0: i32) -> (i32, i32, i32) {
    %c0_i32 = arith.constant 0 : i32
    %c0_i32_0 = arith.constant 0 : i32
    %c0_i32_1 = arith.constant 0 : i32
    return %arg0, %c0_i32, %c0_i32_0 : i32, i32, i32
  }
  func.func @transform_1(%arg0: i32) -> (i32, i32) {
    %c0_i32 = arith.constant 0 : i32
    %c0_i32_0 = arith.constant 0 : i32
    %c0_i32_1 = arith.constant 0 : i32
    return %c0_i32, %c0_i32_0 : i32, i32
  }
  func.func @transform_2(%arg0: i32) -> (i32, i32) {
    %c0_i32 = arith.constant 0 : i32
    %c0_i32_0 = arith.constant 0 : i32
    %c0_i32_1 = arith.constant 0 : i32
    return %c0_i32, %c0_i32_0 : i32, i32
  }
  func.func @transform_3(%arg0: i32) -> (i32, i32) {
    %c0_i32 = arith.constant 0 : i32
    %c0_i32_0 = arith.constant 0 : i32
    %c0_i32_1 = arith.constant 0 : i32
    return %c0_i32, %c0_i32_0 : i32, i32
  }
  func.func @transform_4(%arg0: i32) -> i32 {
    %c0_i32 = arith.constant 0 : i32
    %c0_i32_0 = arith.constant 0 : i32
    return %c0_i32 : i32
  }
  func.func @transform_5(%arg0: i32) -> (i32, i32, i32) {
    %c0_i32 = arith.constant 0 : i32
    %c0_i32_0 = arith.constant 0 : i32
    %c0_i32_1 = arith.constant 0 : i32
    return %arg0, %c0_i32, %c0_i32_0 : i32, i32, i32
  }
}

</mosaic_0001>

<llo_original>
// kernel: tpu_custom_call.1
$region0: #{tpu_custom_call.1}
  #allocation0 [shape = 'u32[]', space=smem, size = 0x4, offset = 0x4, fixed_abs, tag = 'smem constant byte address 0x4 - core index']
  #allocation1 [shape = 'u32[144,128]{1,0:T(1,128)}', space=vmem, size = 0x12000, scoped, tag = 'internal scratch']
  #allocation2 [shape = 'f32[1]{0:T(128)S(6)}', space=smem, size = 0x200, scoped, tag = 'scoped memory for tpu_custom_call.1']
  %s0 = inlined_call_operand.hbm [shape: f32[2,16,256], index: 0, kind: input, shape index: {}]
  %s1 = inlined_call_operand.vmem [shape: f32[2,16], index: 1, kind: input, shape index: {}]
  %s2 = inlined_call_operand.vmem [shape: f32[2,1], index: 2, kind: input, shape index: {}]
  %s3 = inlined_call_operand.vmem [shape: f32[2,1], index: 3, kind: input, shape index: {}]
  %s4 = inlined_call_operand.<no memory space> [shape: f32[1], index: 4, kind: input, shape index: {}]
  %s5 = inlined_call_operand.hbm [shape: f32[2,16,256], index: 5, kind: output, shape index: {}]
  %s6 = sld [smem:[#allocation0]]
  $region57: #{tpu_custom_call.1} parent=0
    _
  %s8 = ssub.s32 1, %s6
  %s9 = scalar_select 0, %s8, %s6
  %10 = sst [smem:[#allocation2]] %s4
  $region1: #{tpu_custom_call.1} parent=0
    #allocation3 [shape = 'u8[32768]{0}', space=vmem, size = 0x8000, scoped, tag = 'input window, operand 0']
    #allocation4 [shape = 's32[2]{0}', space=sflag, size = 0x8, scoped, tag = 'scoped memory for tpu_custom_call.1']
    #allocation5 [shape = 's32[2]{0}', space=sflag, size = 0x8, scoped, tag = 'scoped memory for tpu_custom_call.1']
    #allocation6 [shape = 'u8[32768]{0}', space=vmem, size = 0x8000, scoped, tag = 'output window, operand 0']
    %11 = vsyncpa [#allocation4], 0
    %s12 = scalar_lea.sflag [#allocation4], 1
    %13 = vsyncpa %s12, 0
    %14 = vsyncpa [#allocation5], 0
    %s15 = scalar_lea.sflag [#allocation5], 1
    %16 = vsyncpa %s15, 0
    loop: start=0, step=1, limit=4
    $region2: #{tpu_custom_call.1} parent=1 // loop_pre_header
      _
    $region3: #{tpu_custom_call.1} parent=1 // loop_header
      %s18 = sphi 0, %s22
      %p19 = scmp.ge.s32.totalorder %s18, 4
      %s28 = sphi 0, %s30
      %s31 = sphi 0, %s28
      %s32 = sphi 0, %s31
      %s48 = sphi 0, %s32
      %s52 = sphi 0, %s52
      %s54 = sphi 0, %s52
      %s55 = sphi 0, %s54
      %s69 = sphi 0, %s55
      %s73 = sphi 0, %s73
      %s75 = sphi 0, %s73
      %s76 = sphi 0, %s75
      %s90 = sphi 0, %s76
      %s94 = sphi 0, %s94
      %s96 = sphi 0, %s94
      %s97 = sphi 0, %s96
      %s111 = sphi 0, %s97
      %s115 = sphi 0, %s115
      %s117 = sphi 0, %s115
      %s118 = sphi 0, %s117
      %s132 = sphi 0, %s118
      %s138 = sphi 0, %s140
      %s141 = sphi 0, %s138
      %s142 = sphi 0, %s141
      %s158 = sphi 0, %s142
    $region4: #{tpu_custom_call.1} parent=1 // loop_header_branch
      %21 = sbr.rel (%p19) target = $region8
    $region5: #{tpu_custom_call.1} parent=1 // loop_body
      %s23 = ssub.s32 %s18, 1
      %s24 = ssub.s32 %s18, 2
      %s25 = sadd.s32 %s18, 1
      %s26 = ssub.s32 %s18, %s25
      %p27 = scmp.eq.s32.totalorder %s26, 0
      %s29 = sadd.s32 %s28, 1
      %s30 = scalar_select %p27, %s28, %s29
      %p33 = pneg %p27
      %p34 = scmp.eq.s32.totalorder %s18, 1
      %p35 = por %p33, %p34
      %p36 = scmp.ne.s32.totalorder %s28, %s31
      %p37 = scmp.eq.s32.totalorder %s18, 0
      %p38 = por %p36, %p37
      %p39 = scmp.ne.s32.totalorder %s28, %s31
      %p40 = scmp.eq.s32.totalorder %s23, 1
      %p41 = por %p39, %p40
      %p42 = scmp.ne.s32.totalorder %s31, %s32
      %p43 = scmp.eq.s32.totalorder %s23, 0
      %p44 = por %p42, %p43
      %p45 = scmp.ne.s32.totalorder %s31, %s32
      %p46 = scmp.eq.s32.totalorder %s24, 1
      %p47 = por %p45, %p46
      %p49 = scmp.ne.s32.totalorder %s32, %s48
      %p50 = scmp.eq.s32.totalorder %s24, 0
      %p51 = por %p49, %p50
      %s53 = sadd.s32 %s52, 1
      %p56 = scmp.eq.s32.totalorder %s18, 1
      %p57 = scmp.ne.s32.totalorder %s52, %s54
      %p58 = scmp.eq.s32.totalorder %s18, 0
      %p59 = por %p57, %p58
      %p60 = scmp.ne.s32.totalorder %s52, %s54
      %p61 = scmp.eq.s32.totalorder %s23, 1
      %p62 = por %p60, %p61
      %p63 = scmp.ne.s32.totalorder %s54, %s55
      %p64 = scmp.eq.s32.totalorder %s23, 0
      %p65 = por %p63, %p64
      %p66 = scmp.ne.s32.totalorder %s54, %s55
      %p67 = scmp.eq.s32.totalorder %s24, 1
      %p68 = por %p66, %p67
      %p70 = scmp.ne.s32.totalorder %s55, %s69
      %p71 = scmp.eq.s32.totalorder %s24, 0
      %p72 = por %p70, %p71
      %s74 = sadd.s32 %s73, 1
      %p77 = scmp.eq.s32.totalorder %s18, 1
      %p78 = scmp.ne.s32.totalorder %s73, %s75
      %p79 = scmp.eq.s32.totalorder %s18, 0
      %p80 = por %p78, %p79
      %p81 = scmp.ne.s32.totalorder %s73, %s75
      %p82 = scmp.eq.s32.totalorder %s23, 1
      %p83 = por %p81, %p82
      %p84 = scmp.ne.s32.totalorder %s75, %s76
      %p85 = scmp.eq.s32.totalorder %s23, 0
      %p86 = por %p84, %p85
      %p87 = scmp.ne.s32.totalorder %s75, %s76
      %p88 = scmp.eq.s32.totalorder %s24, 1
      %p89 = por %p87, %p88
      %p91 = scmp.ne.s32.totalorder %s76, %s90
      %p92 = scmp.eq.s32.totalorder %s24, 0
      %p93 = por %p91, %p92
      %s95 = sadd.s32 %s94, 1
      %p98 = scmp.eq.s32.totalorder %s18, 1
      %p99 = scmp.ne.s32.totalorder %s94, %s96
      %p100 = scmp.eq.s32.totalorder %s18, 0
      %p101 = por %p99, %p100
      %p102 = scmp.ne.s32.totalorder %s94, %s96
      %p103 = scmp.eq.s32.totalorder %s23, 1
      %p104 = por %p102, %p103
      %p105 = scmp.ne.s32.totalorder %s96, %s97
      %p106 = scmp.eq.s32.totalorder %s23, 0
      %p107 = por %p105, %p106
      %p108 = scmp.ne.s32.totalorder %s96, %s97
      %p109 = scmp.eq.s32.totalorder %s24, 1
      %p110 = por %p108, %p109
      %p112 = scmp.ne.s32.totalorder %s97, %s111
      %p113 = scmp.eq.s32.totalorder %s24, 0
      %p114 = por %p112, %p113
      %s116 = sadd.s32 %s115, 1
      %p119 = scmp.eq.s32.totalorder %s18, 1
      %p120 = scmp.ne.s32.totalorder %s115, %s117
      %p121 = scmp.eq.s32.totalorder %s18, 0
      %p122 = por %p120, %p121
      %p123 = scmp.ne.s32.totalorder %s115, %s117
      %p124 = scmp.eq.s32.totalorder %s23, 1
      %p125 = por %p123, %p124
      %p126 = scmp.ne.s32.totalorder %s117, %s118
      %p127 = scmp.eq.s32.totalorder %s23, 0
      %p128 = por %p126, %p127
      %p129 = scmp.ne.s32.totalorder %s117, %s118
      %p130 = scmp.eq.s32.totalorder %s24, 1
      %p131 = por %p129, %p130
      %p133 = scmp.ne.s32.totalorder %s118, %s132
      %p134 = scmp.eq.s32.totalorder %s24, 0
      %p135 = por %p133, %p134
      %s136 = ssub.s32 %s18, %s25
      %p137 = scmp.eq.s32.totalorder %s136, 0
      %s139 = sadd.s32 %s138, 1
      %s140 = scalar_select %p137, %s138, %s139
      %p143 = pneg %p137
      %p144 = scmp.eq.s32.totalorder %s18, 1
      %p145 = por %p143, %p144
      %p146 = scmp.ne.s32.totalorder %s138, %s141
      %p147 = scmp.eq.s32.totalorder %s18, 0
      %p148 = por %p146, %p147
      %p149 = scmp.ne.s32.totalorder %s138, %s141
      %p150 = scmp.eq.s32.totalorder %s23, 1
      %p151 = por %p149, %p150
      %p152 = scmp.ne.s32.totalorder %s141, %s142
      %p153 = scmp.eq.s32.totalorder %s23, 0
      %p154 = por %p152, %p153
      %p155 = scmp.ne.s32.totalorder %s141, %s142
      %p156 = scmp.eq.s32.totalorder %s24, 1
      %p157 = por %p155, %p156
      %p159 = scmp.ne.s32.totalorder %s142, %s158
      %p160 = scmp.eq.s32.totalorder %s24, 0
      %p161 = por %p159, %p160
      %p162 = scmp.le.s32.totalorder 1, %s18
      %p163 = scmp.lt.s32.totalorder %s18, 3
      %p164 = pnand %p162, %p163
      %p165 = pneg %p164
      // Predicated region
      $region9: #{tpu_custom_call.1} parent=5 // pred_check
        _
      $region10: #{tpu_custom_call.1} parent=5 // pred_check_branch
        %167 = sbr.rel (%p164) target = $region12
      $region11: #{tpu_custom_call.1} parent=5 // pred_region
        %s168 = ssub.s32 %s18, 1
        // Predicated region
        $region13: #{tpu_custom_call.1} parent=11 // pred_check
          %p169 = pneg %p65
        $region14: #{tpu_custom_call.1} parent=11 // pred_check_branch
          %171 = sbr.rel (%p169) target = $region16
        $region15: #{tpu_custom_call.1} parent=11 // pred_region
          _
        $region16: #{tpu_custom_call.1} parent=11 // pred_fallthru
          _
        // Predicated region
        $region17: #{tpu_custom_call.1} parent=11 // pred_check
          %p172 = pneg %p86
        $region18: #{tpu_custom_call.1} parent=11 // pred_check_branch
          %174 = sbr.rel (%p172) target = $region20
        $region19: #{tpu_custom_call.1} parent=11 // pred_region
          _
        $region20: #{tpu_custom_call.1} parent=11 // pred_fallthru
          _
        // Predicated region
        $region21: #{tpu_custom_call.1} parent=11 // pred_check
          %p175 = pneg %p107
        $region22: #{tpu_custom_call.1} parent=11 // pred_check_branch
          %177 = sbr.rel (%p175) target = $region24
        $region23: #{tpu_custom_call.1} parent=11 // pred_region
          _
        $region24: #{tpu_custom_call.1} parent=11 // pred_fallthru
          _
        // Predicated region
        $region25: #{tpu_custom_call.1} parent=11 // pred_check
          %p178 = pneg %p128
        $region26: #{tpu_custom_call.1} parent=11 // pred_check_branch
          %180 = sbr.rel (%p178) target = $region28
        $region27: #{tpu_custom_call.1} parent=11 // pred_region
          _
        $region28: #{tpu_custom_call.1} parent=11 // pred_fallthru
          _
      $region12: #{tpu_custom_call.1} parent=5 // pred_fallthru
        _
      %p181 = scmp.lt.s32.totalorder %s18, 2
      // Predicated region
      $region29: #{tpu_custom_call.1} parent=5 // pred_check
        %p182 = pneg %p181
      $region30: #{tpu_custom_call.1} parent=5 // pred_check_branch
        %184 = sbr.rel (%p182) target = $region32
      $region31: #{tpu_custom_call.1} parent=5 // pred_region
        // Predicated region
        $region33: #{tpu_custom_call.1} parent=31 // pred_check
          %p185 = pneg %p38
        $region34: #{tpu_custom_call.1} parent=31 // pred_check_branch
          %187 = sbr.rel (%p185) target = $region36
        $region35: #{tpu_custom_call.1} parent=31 // pred_region
          %s188 = sand.u32 %s28, 1
          %s189 = scalar_lea.sflag [#allocation4], %s188
          %s190 = sand.u32 %s28, 1
          %s191 = smul.addr %s190, 32
          %s192 = scalar_lea.vmem [#allocation3], %s191
          %s194 = ssub.s32 512, 512
          %195 = vsyncadd %s189, %s194
          %s196 = smul.addr %s18, 4
          %s197 = smul.addr %s196, 128
          %s198 = scalar_lea.hbm %s0, %s197
          %s199 = sshll.u32 %s192, 4
          %s200 = int_to_ptr.vmem [resolvable:$true] %s199
          %205 = dma.hbm_to_vmem [thread:$0]  %s198, 512, %s200, %s189, 256, 256, 16
        $region36: #{tpu_custom_call.1} parent=31 // pred_fallthru
          _
      $region32: #{tpu_custom_call.1} parent=5 // pred_fallthru
        _
      %p206 = scmp.le.s32.totalorder 1, %s18
      %p207 = scmp.lt.s32.totalorder %s18, 3
      %p208 = pnand %p206, %p207
      %p209 = pneg %p208
      // Predicated region
      $region37: #{tpu_custom_call.1} parent=5 // pred_check
        _
      $region38: #{tpu_custom_call.1} parent=5 // pred_check_branch
        %211 = sbr.rel (%p208) target = $region40
      $region39: #{tpu_custom_call.1} parent=5 // pred_region
        %s212 = ssub.s32 %s18, 1
        %s213 = sand.u32 %s31, 1
        %s214 = scalar_lea.sflag [#allocation4], %s213
        %s215 = sand.u32 %s31, 1
        %s216 = smul.addr %s215, 32
        %s217 = scalar_lea.vmem [#allocation3], %s216
        // Predicated region
        $region41: #{tpu_custom_call.1} parent=39 // pred_check
          %p218 = pneg %p44
        $region42: #{tpu_custom_call.1} parent=39 // pred_check_branch
          %220 = sbr.rel (%p218) target = $region44
        $region43: #{tpu_custom_call.1} parent=39 // pred_region
          %221 = dma.done %s214, 512
        $region44: #{tpu_custom_call.1} parent=39 // pred_fallthru
          _
        %s222 = sand.u32 %s31, 1
        %s223 = scalar_lea.sflag [#allocation4], %s222
        %s224 = sand.u32 %s31, 1
        %s225 = smul.addr %s224, 32
        %s226 = scalar_lea.vmem [#allocation3], %s225
        %p227 = pneg %p44
        %p228 = pneg %p41
        %p229 = pneg %p65
        %p230 = pneg %p62
        %p231 = pneg %p86
        %p232 = pneg %p83
        %p233 = pneg %p107
        %p234 = pneg %p104
        %p235 = pneg %p128
        %p236 = pneg %p125
        %p237 = pneg %p154
        %p238 = pneg %p151
        %s239 = sand.u32 %s141, 1
        %s240 = scalar_lea.sflag [#allocation5], %s239
        %s241 = sand.u32 %s141, 1
        %s242 = smul.addr %s241, 32
        %s243 = scalar_lea.vmem [#allocation6], %s242
        %v244 = vld [vmem:[%s217] sm:$0xff]
        %v245 = vld [vmem:[%s217 + $0x8] sm:$0xff]
        %v246 = vld [vmem:[%s217 + $0x10] sm:$0xff]
        %v247 = vld [vmem:[%s217 + $0x18] sm:$0xff]
        %v248 = vld [vmem:[%s1] sm:$0x3]
        %v249 = vld [vmem:[%s2] sm:$0x3]
        %251 = vset.pattern.permute.xlu0 0
        %252 = vperm.xlu0 %251, %v249
        %v253 = vpop.permute.xlu0 %252
        %vm255 = vcmask 130048
        %v257 = vsel %vm255, %v248, 0
        %259 = vmatprep.subr.mxu0 %v245
        %260 = vmatpush1.msra.mxu0 %v244
        %261 = vmatprep.subr.mxu0 %v247
        %262 = vmatpush1.msra.mxu0 %v246
        %263 = vmatprep.subr.mxu0 0.0
        %264 = vmatpush1.msra.mxu0 0.0
        %265 = vmatprep.subr.mxu0 0.0
        %266 = vmatpush1.msra.mxu0 0.0
        %267 = vmatprep.subr.mxu0 0.0
        %268 = vmatpush1.msra.mxu0 0.0
        %269 = vmatprep.subr.mxu0 0.0
        %270 = vmatpush1.msra.mxu0 0.0
        %271 = vmatprep.subr.mxu0 0.0
        %272 = vmatpush1.msra.mxu0 0.0
        %273 = vmatprep.subr.mxu0 0.0
        %274 = vmatpush1.msra.mxu0 0.0
        %275 = vmatprep.subr.mxu0 0.0
        %276 = vmatpush1.msra.mxu0 0.0
        %277 = vmatprep.subr.mxu0 0.0
        %278 = vmatpush1.msra.mxu0 0.0
        %279 = vmatprep.subr.mxu0 0.0
        %280 = vmatpush1.msra.mxu0 0.0
        %281 = vmatprep.subr.mxu0 0.0
        %282 = vmatpush1.msra.mxu0 0.0
        %283 = vmatprep.subr.mxu0 0.0
        %284 = vmatpush1.msra.mxu0 0.0
        %285 = vmatprep.subr.mxu0 0.0
        %286 = vmatpush1.msra.mxu0 0.0
        %287 = vmatprep.subr.mxu0 0.0
        %288 = vmatpush1.msra.mxu0 0.0
        %289 = vmatprep.subr.mxu0 0.0
        %290 = vmatpush1.msra.mxu0 0.0
        %291 = vmatprep.subr.mxu0 0.0
        %292 = vmatpush1.msra.mxu0 0.0
        %293 = vmatprep.subr.mxu0 0.0
        %294 = vmatpush1.msra.mxu0 0.0
        %295 = vmatprep.subr.mxu0 0.0
        %296 = vmatpush1.msra.mxu0 0.0
        %297 = vmatprep.subr.mxu0 0.0
        %298 = vmatpush1.msra.mxu0 0.0
        %299 = vmatprep.subr.mxu0 0.0
        %300 = vmatpush1.msra.mxu0 0.0
        %301 = vmatprep.subr.mxu0 0.0
        %302 = vmatpush1.msra.mxu0 0.0
        %303 = vmatprep.subr.mxu0 0.0
        %304 = vmatpush1.msra.mxu0 0.0
        %305 = vmatprep.subr.mxu0 0.0
        %306 = vmatpush1.msra.mxu0 0.0
        %307 = vmatprep.subr.mxu0 0.0
        %308 = vmatpush1.msra.mxu0 0.0
        %309 = vmatprep.subr.mxu0 0.0
        %310 = vmatpush1.msra.mxu0 0.0
        %311 = vmatprep.subr.mxu0 0.0
        %312 = vmatpush1.msra.mxu0 0.0
        %313 = vmatprep.subr.mxu0 0.0
        %314 = vmatpush1.msra.mxu0 0.0
        %315 = vmatprep.subr.mxu0 0.0
        %316 = vmatpush1.msra.mxu0 0.0
        %317 = vmatprep.subr.mxu0 0.0
        %318 = vmatpush1.msra.mxu0 0.0
        %319 = vmatprep.subr.mxu0 0.0
        %320 = vmatpush1.msra.mxu0 0.0
        %321 = vmatprep.subr.mxu0 0.0
        %322 = vmatpush1.msra.mxu0 0.0
        %323 = vmatprep.mubr.f32.mxu0 0.0
        %324 = vmatmul.mubr.f32.gmra.mrb[0].mxu0 %v257
        %v325 = vpop.f32.mrb[0].mxu0
        %v326 = vadd.f32 %v253, %v325
        %v327 = vpop.f32.mrb[0].mxu0
        %v328 = vadd.f32 %v253, %v327
        %329 = vdwg.mxu0
        %v330 = vmax.f32 %v326, 0.0
        %v331 = vmax.f32 %v328, 0.0
        %v332 = vld [vmem:[%s3] sm:$0x3]
        %334 = vset.pattern.permute.xlu0 0
        %335 = vperm.xlu0 %334, %v332
        %v336 = vpop.permute.xlu0 %335
        %v338 = vmul.f32 %v330, %v336
        %v339 = vmul.f32 %v331, %v336
        %vm340 = vcmask 1041408
        %v341 = vsel %vm340, %v338, 0.0
        %v342 = vrot.slane %v341, 4
        %v343 = vadd.f32 %v341, %v342
        %v344 = vrot.slane %v343, 2
        %v345 = vadd.f32 %v343, %v344
        %v346 = vrot.slane %v345, 1
        %v347 = vadd.f32 %v345, %v346
        %v348 = vsel %vm340, %v339, 0.0
        %v349 = vrot.slane %v348, 4
        %v350 = vadd.f32 %v348, %v349
        %v351 = vrot.slane %v350, 2
        %v352 = vadd.f32 %v350, %v351
        %v353 = vrot.slane %v352, 1
        %v354 = vadd.f32 %v352, %v353
        %s355 = sld [smem:[#allocation2]]
        %v356 = vstv %s355
        %v357 = vadd.f32 %v347, %v356
        %v358 = vadd.f32 %v354, %v356
        %v359 = vxor.u32 %v357, 2147483648
        %v360 = vxor.u32 %v358, 2147483648
        %v361 = vmul.f32 %v359, 1.442695
        %v362 = vpow.pop %v361
        %v363 = vmul.f32 %v360, 1.442695
        %v364 = vpow.pop %v363
        %v365 = vadd.f32 %v362, 1.0
        %v366 = vadd.f32 %v364, 1.0
        %v367 = vrcp.pop %v365
        %v368 = vmul.f32 1.0, %v367
        %v369 = vrcp.pop %v366
        %v370 = vmul.f32 1.0, %v369
        %v371 = vadd.f32 %v244, %v245
        %372 = vadd.xlane.f32.xlu0 %v371
        %v373 = vpop.xlane.xlu0 %372
        %v374 = vadd.f32 %v246, %v247
        %375 = vadd.xlane.f32.xlu0 %v374
        %v376 = vpop.xlane.xlu0 %375
        %v377 = vmul.f32 %v373, 0.00390625
        %v378 = vmul.f32 %v376, 0.00390625
        %vm379 = vcmask 7168
        %v380 = vsel %vm379, %v377, 0.0
        %v381 = vsel %vm379, %v378, 0.0
        %v382 = vadd.f32 %v380, %v381
        %383 = vadd.xlane.f32.xlu0 %v382
        %v384 = vpop.xlane.xlu0 %383
        %v385 = vrot.slane %v384, 4
        %v386 = vadd.f32 %v384, %v385
        %v387 = vrot.slane %v386, 2
        %v388 = vadd.f32 %v386, %v387
        %v389 = vrot.slane %v388, 1
        %v390 = vadd.f32 %v388, %v389
        %s391 = vtos %v390
        %v392 = vstv %s391
        %v393 = vmul.f32 %v377, %v392
        %v394 = vmul.f32 %v378, %v392
        %v395 = vxor.u32 %v393, 2147483648
        %v396 = vxor.u32 %v394, 2147483648
        %v397 = vmul.f32 %v395, 1.442695
        %v398 = vpow.pop %v397
        %v399 = vmul.f32 %v396, 1.442695
        %v400 = vpow.pop %v399
        %v401 = vadd.f32 %v398, 1.0
        %v402 = vadd.f32 %v400, 1.0
        %v403 = vrcp.pop %v401
        %v404 = vmul.f32 1.0, %v403
        %v405 = vrcp.pop %v402
        %v406 = vmul.f32 1.0, %v405
        %v407 = vmul.f32 %v244, %v368
        %v408 = vmul.f32 %v245, %v370
        %v409 = vmul.f32 %v246, %v368
        %v410 = vmul.f32 %v247, %v370
        %v411 = vmul.f32 %v407, %v404
        %v412 = vmul.f32 %v408, %v404
        %v413 = vmul.f32 %v409, %v406
        %v414 = vmul.f32 %v410, %v406
        %415 = vst [vmem:[%s243] sm:$0xff] %v411
        %416 = vst [vmem:[%s243 + $0x8] sm:$0xff] %v412
        %417 = vst [vmem:[%s243 + $0x10] sm:$0xff] %v413
        %418 = vst [vmem:[%s243 + $0x18] sm:$0xff] %v414
        %s419 = sand.u32 %s141, 1
        %s420 = scalar_lea.sflag [#allocation5], %s419
        %s421 = sand.u32 %s141, 1
        %s422 = smul.addr %s421, 32
        %s423 = scalar_lea.vmem [#allocation6], %s422
        // Predicated region
        $region45: #{tpu_custom_call.1} parent=39 // pred_check
          %p424 = pneg %p151
        $region46: #{tpu_custom_call.1} parent=39 // pred_check_branch
          %426 = sbr.rel (%p424) target = $region48
        $region47: #{tpu_custom_call.1} parent=39 // pred_region
          %s428 = ssub.s32 512, 512
          %429 = vsyncadd %s420, %s428
          %s430 = smul.addr %s23, 4
          %s431 = smul.addr %s430, 128
          %s432 = scalar_lea.hbm %s5, %s431
          %s433 = sshll.u32 %s423, 4
          %s434 = int_to_ptr.vmem [resolvable:$true] %s433
          %439 = dma.vmem_to_hbm [thread:$0]  %s434, 512, %s432, %s420, 256, 256, 16
        $region48: #{tpu_custom_call.1} parent=39 // pred_fallthru
          _
      $region40: #{tpu_custom_call.1} parent=5 // pred_fallthru
        _
      %p440 = scmp.le.s32.totalorder 2, %s18
      // Predicated region
      $region49: #{tpu_custom_call.1} parent=5 // pred_check
        %p441 = pneg %p440
      $region50: #{tpu_custom_call.1} parent=5 // pred_check_branch
        %443 = sbr.rel (%p441) target = $region52
      $region51: #{tpu_custom_call.1} parent=5 // pred_region
        %s444 = ssub.s32 %s18, 2
        // Predicated region
        $region53: #{tpu_custom_call.1} parent=51 // pred_check
          %p445 = pneg %p157
        $region54: #{tpu_custom_call.1} parent=51 // pred_check_branch
          %447 = sbr.rel (%p445) target = $region56
        $region55: #{tpu_custom_call.1} parent=51 // pred_region
          %s448 = sand.u32 %s142, 1
          %s449 = scalar_lea.sflag [#allocation5], %s448
          %s450 = sand.u32 %s142, 1
          %s451 = smul.addr %s450, 32
          %s452 = scalar_lea.vmem [#allocation6], %s451
          %453 = dma.done %s449, 512
        $region56: #{tpu_custom_call.1} parent=51 // pred_fallthru
          _
      $region52: #{tpu_custom_call.1} parent=5 // pred_fallthru
        _
    $region6: #{tpu_custom_call.1} parent=1 // loop_footer
      %s22 = sadd.s32 1, %s18
    $region7: #{tpu_custom_call.1} parent=1 // loop_footer_branch
      %17 = sbr.rel target = $region3
    $region8: #{tpu_custom_call.1} parent=1 // loop_exit
      _
    %454 = vsyncpa [#allocation4], 1
    %s455 = scalar_lea.sflag [#allocation4], 1
    %456 = vsyncpa %s455, 1
    %457 = vsyncpa [#allocation5], 1
    %s458 = scalar_lea.sflag [#allocation5], 1
    %459 = vsyncpa %s458, 1

</llo_original>
